<compile_context>
chip_gen: v7x
topology: tpu7x:2x2x1
jax: 0.10.0
libtpu: 0.0.40
codegen_flags: <defaults>
</compile_context>

<pallas_src>
import numpy as np
import jax
import jax.numpy as jnp
from jax.experimental import pallas as pl
from jax.experimental.pallas import tpu as pltpu

H, W, CIN, COUT, K = 5, 5, 8, 4, 3
OH, OW = H - K + 1, W - K + 1            # 3, 3
FLAT_IN = H * W * CIN                    # 200
FLAT_CONV = COUT * OH * OW               # 36  (matches nn.Linear(36, 64))
FC2 = 64
NACT = 25
FC1_PAD = 128                            # fc1 width padded to one lane-dense vreg
NPAD = 128                               # action logits padded to one vreg width
NEG_BIG = -1e30                          # masks padded action lanes before softmax


def _roundup(x, m):
    return ((x + m - 1) // m) * m


def actor_kernel(x_ref, wf_ref, bf_ref, w2_ref, b2_ref, out_ref):
    # Cast input to bf16 here (avoids a separate wrapper astype pass).
    x = x_ref[...].astype(jnp.bfloat16)
    # fused conv+fc1: (TB,200)bf16 x (200,128)bf16 -> f32, + bias, ReLU
    h = jnp.dot(x, wf_ref[...], preferred_element_type=jnp.float32) + bf_ref[...]
    h = jnp.maximum(h, 0.0)
    # pi head: (TB,128) x (128,128) -> f32 logits (padded lanes get -1e30 bias)
    logits = jnp.dot(h.astype(w2_ref.dtype), w2_ref[...],
                     preferred_element_type=jnp.float32) + b2_ref[...]
    # numerically stable row softmax; padded lanes -> exp(-1e30 - m) == 0
    m = jnp.max(logits, axis=-1, keepdims=True)
    e = jnp.exp(logits - m)
    # NOTE: approx reciprocal -> rows sum to 1 only to ~1e-3; use approx=False
    # if downstream sampling / log-prob needs exact normalization.
    inv = pl.reciprocal(jnp.sum(e, axis=-1, keepdims=True), approx=True)
    out_ref[...] = (e * inv).astype(out_ref.dtype)


def make_conv_dense(w_conv):
    """(COUT, CIN, K, K) torch conv weight -> dense (FLAT_IN, FLAT_CONV) matrix."""
    w = np.asarray(w_conv, dtype=np.float32)
    dense = np.zeros((FLAT_IN, FLAT_CONV), dtype=np.float32)
    for co in range(COUT):
        for oh in range(OH):
            for ow in range(OW):
                col = co * (OH * OW) + oh * OW + ow
                for ci in range(CIN):
                    for kh in range(K):
                        for kw in range(K):
                            row = (oh + kh) * (W * CIN) + (ow + kw) * CIN + ci
                            dense[row, col] = w[co, ci, kh, kw]
    return dense


def init_params(key):
    ks = jax.random.split(key, 6)

    def u(k, shape, fan_in):
        b = 1.0 / np.sqrt(fan_in)
        return jax.random.uniform(k, shape, jnp.float32, -b, b)

    # PyTorch-layout raw parameters (deterministic, synthetic)
    w_conv = u(ks[0], (COUT, CIN, K, K), CIN * K * K)
    b_conv = u(ks[1], (COUT,), CIN * K * K)
    w1 = u(ks[2], (FC2, FLAT_CONV), FLAT_CONV)    # (out, in)
    b1 = u(ks[3], (FC2,), FLAT_CONV)
    w2 = u(ks[4], (NACT, FC2), FC2)
    b2 = u(ks[5], (NACT,), FC2)

    # ---- offline fusion conv+fc1 (exact: no nonlinearity in between) ----
    wc_dense = make_conv_dense(w_conv)                        # (200, 36)
    bc = np.repeat(np.asarray(b_conv), OH * OW)[None, :]      # (1, 36), col = co*9+p
    w1_k = np.asarray(w1).T                                   # (36, 64) kernel layout
    w_fused = wc_dense @ w1_k                                 # (200, 64)
    b_fused = bc @ w1_k + np.asarray(b1)[None, :]             # (1, 64)

    # lane-dense padding: fc1 64->128 (zeros), action head 25->128
    w_fused_p = np.zeros((FLAT_IN, FC1_PAD), np.float32)
    w_fused_p[:, :FC2] = w_fused
    b_fused_p = np.zeros((1, FC1_PAD), np.float32)
    b_fused_p[:, :FC2] = b_fused

    w2_p = np.zeros((FC1_PAD, NPAD), np.float32)              # padded rows/cols = 0
    w2_p[:FC2, :NACT] = np.asarray(w2).T
    b2_p = np.full((1, NPAD), NEG_BIG, np.float32)            # padded lanes masked
    b2_p[:, :NACT] = np.asarray(b2)[None, :]

    kernel_params = dict(
        w_fused=jnp.asarray(w_fused_p, dtype=jnp.bfloat16),
        b_fused=jnp.asarray(b_fused_p, dtype=jnp.float32),
        w2=jnp.asarray(w2_p, dtype=jnp.bfloat16),
        b2=jnp.asarray(b2_p, dtype=jnp.float32),
    )
    raw = (w_conv, b_conv, w1, b1, w2, b2)
    return kernel_params, raw


def actor_forward(state, params, *, tb=4096, min_steps=2):
    """Returns a lane-dense (Bp, 128) bf16 slab of softmax probabilities.

    Rows >= B (batch padding) and lanes >= 25 are exactly 0; consumers
    (argmax / sampling / loss) can use the slab directly, or slice
    [:B, :25] themselves if they need the narrow view.
    """
    B = state.shape[0]
    x = state.reshape(B, FLAT_IN)          # contiguous reshape, no copy

    # Batch tile: large (amortize per-step overhead), but ensure >=2 grid steps
    # for reasonable B (v7x has 2 TCs) and cap at 8192 for v7x VMEM headroom.
    TB = max(16, min(tb, _roundup(-(-B // min_steps), 16), 8192))
    Bp = _roundup(B, TB)
    if Bp != B:
        x = jnp.pad(x, ((0, Bp - B), (0, 0)))   # only when B % TB != 0

    grid = (Bp // TB,)
    out = pl.pallas_call(
        actor_kernel,
        out_shape=jax.ShapeDtypeStruct((Bp, NPAD), jnp.bfloat16),
        grid_spec=pltpu.PrefetchScalarGridSpec(
            num_scalar_prefetch=0,
            grid=grid,
            in_specs=[
                pl.BlockSpec((TB, FLAT_IN), lambda i: (i, 0)),       # x: tiled over batch
                pl.BlockSpec((FLAT_IN, FC1_PAD), lambda i: (0, 0)),  # fused weight (resident)
                pl.BlockSpec((1, FC1_PAD), lambda i: (0, 0)),        # fused bias
                pl.BlockSpec((FC1_PAD, NPAD), lambda i: (0, 0)),     # pi weight (padded)
                pl.BlockSpec((1, NPAD), lambda i: (0, 0)),           # pi bias (padded, -1e30)
            ],
            out_specs=pl.BlockSpec((TB, NPAD), lambda i: (i, 0)),    # lane-dense bf16 slab
        ),
        compiler_params=pltpu.CompilerParams(
            dimension_semantics=("parallel",)),
    )(x, params["w_fused"], params["b_fused"], params["w2"], params["b2"])
    return out


def reference_forward(state, raw):
    """Plain-JAX reference mirroring the PyTorch forward exactly (f32)."""
    w_conv, b_conv, w1, b1, w2, b2 = raw
    x = jnp.transpose(state, (0, 3, 1, 2))                 # NCHW
    conv = jax.lax.conv_general_dilated(
        x, w_conv, window_strides=(1, 1), padding='VALID',
        dimension_numbers=('NCHW', 'OIHW', 'NCHW'))
    conv = conv + b_conv[None, :, None, None]
    flat = conv.reshape(conv.shape[0], -1)                  # torch Flatten (NCHW order)
    h = jax.nn.relu(flat @ w1.T + b1)
    return jax.nn.softmax(h @ w2.T + b2, axis=1)


if __name__ == "__main__":
    key = jax.random.PRNGKey(0)
    k_param, k_state = jax.random.split(key)
    params, raw = init_params(k_param)

    B = 2
    state = jax.random.normal(k_state, (B, H, W, CIN), dtype=jnp.float32)

    slab = actor_forward(state, params)          # (Bp, 128) bf16 lane-dense slab
    slab = jax.block_until_ready(slab)

    # Narrow view for the correctness check only (not part of the hot path).
    out = np.asarray(slab[:B, :NACT], dtype=np.float32)

    ref = np.asarray(jax.block_until_ready(reference_forward(state, raw)))
    assert out.shape == (B, NACT)
    assert np.allclose(out, ref, atol=5e-3, rtol=1e-2), np.abs(out - ref).max()
    # bf16 output + approx reciprocal: rows sum to 1 to ~1e-3
    assert np.allclose(out.sum(axis=1), 1.0, atol=1e-2)
    # padded lanes of the slab are exactly zero
    assert np.all(np.asarray(slab[:B, NACT:], dtype=np.float32) == 0.0)

    print("KERNEL_OK")
</pallas_src>

<mosaic_0001>
module attributes {stable_mosaic.version = 11 : i64} {
  func.func @actor_kernel(%arg0: i32, %arg1: memref<16x200xf32, #tpu.memory_space<vmem>>, %arg2: memref<200x128xbf16, #tpu.memory_space<vmem>>, %arg3: memref<1x128xf32, #tpu.memory_space<vmem>>, %arg4: memref<128x128xbf16, #tpu.memory_space<vmem>>, %arg5: memref<1x128xf32, #tpu.memory_space<vmem>>, %arg6: memref<16x128xbf16, #tpu.memory_space<vmem>>) attributes {dimension_semantics = [#tpu.dimension_semantics<parallel>], iteration_bounds = array<i64: 1>, scalar_prefetch = 0 : i64, scratch_operands = 0 : i64, tpu.core_type = #tpu.core_type<tc>, window_params = [{transform_indices = @transform_0, window_bounds = array<i64: 16, 200>}, {pipeline_mode = #tpu.pipeline_mode<synchronous>, transform_indices = @transform_1, window_bounds = array<i64: 200, 128>}, {pipeline_mode = #tpu.pipeline_mode<synchronous>, transform_indices = @transform_2, window_bounds = array<i64: 1, 128>}, {pipeline_mode = #tpu.pipeline_mode<synchronous>, transform_indices = @transform_3, window_bounds = array<i64: 128, 128>}, {pipeline_mode = #tpu.pipeline_mode<synchronous>, transform_indices = @transform_4, window_bounds = array<i64: 1, 128>}, {transform_indices = @transform_5, window_bounds = array<i64: 16, 128>}]} {
    %c0 = arith.constant 0 : index
    %c0_0 = arith.constant 0 : index
    %0 = vector.load %arg1[%c0, %c0_0] : memref<16x200xf32, #tpu.memory_space<vmem>>, vector<16x200xf32>
    %1 = arith.truncf %0 : vector<16x200xf32> to vector<16x200xbf16>
    %c0_1 = arith.constant 0 : index
    %c0_2 = arith.constant 0 : index
    %2 = vector.load %arg2[%c0_1, %c0_2] : memref<200x128xbf16, #tpu.memory_space<vmem>>, vector<200x128xbf16>
    %cst = arith.constant dense<0.000000e+00> : vector<16x128xf32>
    %3 = tpu.matmul %1, %2, %cst {dimension_numbers = #tpu.dot_dimension_numbers<[1], [0], [0], [1], [0, 0, 1, 1], [], []>} : vector<16x200xbf16>, vector<200x128xbf16>, vector<16x128xf32> -> vector<16x128xf32>
    %c0_3 = arith.constant 0 : index
    %c0_4 = arith.constant 0 : index
    %4 = vector.load %arg3[%c0_3, %c0_4] : memref<1x128xf32, #tpu.memory_space<vmem>>, vector<1x128xf32>
    %5 = vector.broadcast %4 : vector<1x128xf32> to vector<16x128xf32>
    %6 = arith.addf %3, %5 : vector<16x128xf32>
    %cst_5 = arith.constant 0.000000e+00 : f32
    %7 = vector.broadcast %cst_5 : f32 to vector<16x128xf32>
    %8 = arith.maximumf %6, %7 : vector<16x128xf32>
    %9 = arith.truncf %8 : vector<16x128xf32> to vector<16x128xbf16>
    %c0_6 = arith.constant 0 : index
    %c0_7 = arith.constant 0 : index
    %10 = vector.load %arg4[%c0_6, %c0_7] : memref<128x128xbf16, #tpu.memory_space<vmem>>, vector<128x128xbf16>
    %cst_8 = arith.constant dense<0.000000e+00> : vector<16x128xf32>
    %11 = tpu.matmul %9, %10, %cst_8 {dimension_numbers = #tpu.dot_dimension_numbers<[1], [0], [0], [1], [0, 0, 1, 1], [], []>} : vector<16x128xbf16>, vector<128x128xbf16>, vector<16x128xf32> -> vector<16x128xf32>
    %c0_9 = arith.constant 0 : index
    %c0_10 = arith.constant 0 : index
    %12 = vector.load %arg5[%c0_9, %c0_10] : memref<1x128xf32, #tpu.memory_space<vmem>>, vector<1x128xf32>
    %13 = vector.broadcast %12 : vector<1x128xf32> to vector<16x128xf32>
    %14 = arith.addf %11, %13 : vector<16x128xf32>
    %cst_11 = arith.constant dense<0xFF800000> : vector<16xf32>
    %15 = vector.multi_reduction <maximumf>, %14, %cst_11 [1] : vector<16x128xf32> to vector<16xf32>
    %16 = vector.shape_cast %15 : vector<16xf32> to vector<16x1xf32>
    %17 = vector.broadcast %16 : vector<16x1xf32> to vector<16x128xf32>
    %18 = arith.subf %14, %17 : vector<16x128xf32>
    %19 = math.exp %18 : vector<16x128xf32>
    %cst_12 = arith.constant dense<0.000000e+00> : vector<16xf32>
    %20 = vector.multi_reduction <add>, %19, %cst_12 [1] : vector<16x128xf32> to vector<16xf32>
    %21 = vector.shape_cast %20 : vector<16xf32> to vector<16x1xf32>
    %22 = tpu.reciprocal %21 {approx = true} : vector<16x1xf32> -> vector<16x1xf32>
    %23 = vector.broadcast %22 : vector<16x1xf32> to vector<16x128xf32>
    %24 = arith.mulf %19, %23 : vector<16x128xf32>
    %25 = arith.truncf %24 : vector<16x128xf32> to vector<16x128xbf16>
    %c0_13 = arith.constant 0 : index
    %c0_14 = arith.constant 0 : index
    %26 = vector.load %arg6[%c0_13, %c0_14] : memref<16x128xbf16, #tpu.memory_space<vmem>>, vector<16x128xbf16>
    tpu.vector_store %arg6[%c0_13, %c0_14], %25 {strides = array<i32>} : memref<16x128xbf16, #tpu.memory_space<vmem>>, vector<16x128xbf16>,
    return
  }
  func.func @transform_0(%arg0: i32) -> (i32, i32) {
    %c0_i32 = arith.constant 0 : i32
    %c0_i32_0 = arith.constant 0 : i32
    return %arg0, %c0_i32 : i32, i32
  }
  func.func @transform_1(%arg0: i32) -> (i32, i32) {
    %c0_i32 = arith.constant 0 : i32
    %c0_i32_0 = arith.constant 0 : i32
    %c0_i32_1 = arith.constant 0 : i32
    return %c0_i32, %c0_i32_0 : i32, i32
  }
  func.func @transform_2(%arg0: i32) -> (i32, i32) {
    %c0_i32 = arith.constant 0 : i32
    %c0_i32_0 = arith.constant 0 : i32
    %c0_i32_1 = arith.constant 0 : i32
    return %c0_i32, %c0_i32_0 : i32, i32
  }
  func.func @transform_3(%arg0: i32) -> (i32, i32) {
    %c0_i32 = arith.constant 0 : i32
    %c0_i32_0 = arith.constant 0 : i32
    %c0_i32_1 = arith.constant 0 : i32
    return %c0_i32, %c0_i32_0 : i32, i32
  }
  func.func @transform_4(%arg0: i32) -> (i32, i32) {
    %c0_i32 = arith.constant 0 : i32
    %c0_i32_0 = arith.constant 0 : i32
    %c0_i32_1 = arith.constant 0 : i32
    return %c0_i32, %c0_i32_0 : i32, i32
  }
  func.func @transform_5(%arg0: i32) -> (i32, i32) {
    %c0_i32 = arith.constant 0 : i32
    %c0_i32_0 = arith.constant 0 : i32
    return %arg0, %c0_i32 : i32, i32
  }
}

</mosaic_0001>

<llo_original>
// kernel: tpu_custom_call.1
$region0: #{tpu_custom_call.1}
  #allocation0 [shape = 'u32[]', space=smem, size = 0x4, offset = 0x4, fixed_abs, tag = 'smem constant byte address 0x4 - core index']
  #allocation1 [shape = 'u32[144,128]{1,0:T(1,128)}', space=vmem, size = 0x12000, scoped, tag = 'internal scratch']
  %s0 = inlined_call_operand.hbm [shape: f32[16,200], index: 0, kind: input, shape index: {}]
  %s1 = inlined_call_operand.hbm [shape: bf16[200,128], index: 1, kind: input, shape index: {}]
  %s2 = inlined_call_operand.vmem [shape: f32[1,128], index: 2, kind: input, shape index: {}]
  %s3 = inlined_call_operand.hbm [shape: bf16[128,128], index: 3, kind: input, shape index: {}]
  %s4 = inlined_call_operand.vmem [shape: f32[1,128], index: 4, kind: input, shape index: {}]
  %s5 = inlined_call_operand.hbm [shape: bf16[16,128], index: 5, kind: output, shape index: {}]
  %s6 = sld [smem:[#allocation0]]
  $region42: #{tpu_custom_call.1} parent=0
    _
  %s8 = ssub.s32 1, %s6
  %s9 = scalar_select 0, %s8, %s6
  $region1: #{tpu_custom_call.1} parent=0
    #allocation2 [shape = 'u8[16384]{0}', space=vmem, size = 0x4000, scoped, tag = 'input window, operand 0, single buffered']
    #allocation3 [shape = 's32[1]{0}', space=sflag, size = 0x4, scoped, tag = 'scoped memory for tpu_custom_call.1']
    #allocation4 [shape = 's32[1]{0}', space=sflag, size = 0x4, scoped, tag = 'scoped memory for tpu_custom_call.1']
    #allocation5 [shape = 'u8[51200]{0}', space=vmem, size = 0xc800, scoped, tag = 'input window, operand 1, single buffered']
    #allocation6 [shape = 's32[1]{0}', space=sflag, size = 0x4, scoped, tag = 'scoped memory for tpu_custom_call.1']
    #allocation7 [shape = 'u8[32768]{0}', space=vmem, size = 0x8000, scoped, tag = 'input window, operand 3, single buffered']
    #allocation8 [shape = 'u8[4096]{0}', space=vmem, size = 0x1000, scoped, tag = 'output window, operand 0, single buffered']
    %10 = vsyncpa [#allocation3], 0
    %11 = vsyncpa [#allocation6], 0
    %12 = vsyncpa [#allocation4], 0
    // Predicated region
    $region2: #{tpu_custom_call.1} parent=1 // pred_check
      _
    $region3: #{tpu_custom_call.1} parent=1 // pred_check_branch
      %14 = sbr.rel (0) target = $region5
    $region4: #{tpu_custom_call.1} parent=1 // pred_region
      %s16 = ssub.s32 512, 512
      %17 = vsyncadd [#allocation3], %s16
      %s18 = sshll.u32 [#allocation2], 4
      %s19 = int_to_ptr.vmem [resolvable:$true] %s18
      %24 = dma.hbm_to_vmem [thread:$0]  %s0, 512, %s19, [#allocation3], 256, 256, 16
    $region5: #{tpu_custom_call.1} parent=1 // pred_fallthru
      _
    // Predicated region
    $region6: #{tpu_custom_call.1} parent=1 // pred_check
      _
    $region7: #{tpu_custom_call.1} parent=1 // pred_check_branch
      %26 = sbr.rel (0) target = $region9
    $region8: #{tpu_custom_call.1} parent=1 // pred_region
      %s28 = ssub.s32 1600, 1600
      %29 = vsyncadd [#allocation6], %s28
      %s30 = sshll.u32 [#allocation5], 4
      %s31 = int_to_ptr.vmem [resolvable:$true] %s30
      %36 = dma.hbm_to_vmem [thread:$0]  %s1, 1600, %s31, [#allocation6], 64, 64, 4
    $region9: #{tpu_custom_call.1} parent=1 // pred_fallthru
      _
    // Predicated region
    $region10: #{tpu_custom_call.1} parent=1 // pred_check
      _
    $region11: #{tpu_custom_call.1} parent=1 // pred_check_branch
      %38 = sbr.rel (0) target = $region13
    $region12: #{tpu_custom_call.1} parent=1 // pred_region
      _
    $region13: #{tpu_custom_call.1} parent=1 // pred_fallthru
      _
    // Predicated region
    $region14: #{tpu_custom_call.1} parent=1 // pred_check
      _
    $region15: #{tpu_custom_call.1} parent=1 // pred_check_branch
      %40 = sbr.rel (0) target = $region17
    $region16: #{tpu_custom_call.1} parent=1 // pred_region
      %s42 = ssub.s32 1024, 1024
      %43 = vsyncadd [#allocation6], %s42
      %s44 = sshll.u32 [#allocation7], 4
      %s45 = int_to_ptr.vmem [resolvable:$true] %s44
      %50 = dma.hbm_to_vmem [thread:$0]  %s3, 1024, %s45, [#allocation6], 64, 64, 4
    $region17: #{tpu_custom_call.1} parent=1 // pred_fallthru
      _
    // Predicated region
    $region18: #{tpu_custom_call.1} parent=1 // pred_check
      _
    $region19: #{tpu_custom_call.1} parent=1 // pred_check_branch
      %52 = sbr.rel (0) target = $region21
    $region20: #{tpu_custom_call.1} parent=1 // pred_region
      _
    $region21: #{tpu_custom_call.1} parent=1 // pred_fallthru
      _
    // Predicated region
    $region22: #{tpu_custom_call.1} parent=1 // pred_check
      _
    $region23: #{tpu_custom_call.1} parent=1 // pred_check_branch
      %54 = sbr.rel (0) target = $region25
    $region24: #{tpu_custom_call.1} parent=1 // pred_region
      %55 = dma.done [#allocation3], 512
    $region25: #{tpu_custom_call.1} parent=1 // pred_fallthru
      _
    // Predicated region
    $region26: #{tpu_custom_call.1} parent=1 // pred_check
      _
    $region27: #{tpu_custom_call.1} parent=1 // pred_check_branch
      %57 = sbr.rel (0) target = $region29
    $region28: #{tpu_custom_call.1} parent=1 // pred_region
      %58 = dma.done [#allocation6], 1600
    $region29: #{tpu_custom_call.1} parent=1 // pred_fallthru
      _
    // Predicated region
    $region30: #{tpu_custom_call.1} parent=1 // pred_check
      _
    $region31: #{tpu_custom_call.1} parent=1 // pred_check_branch
      %60 = sbr.rel (0) target = $region33
    $region32: #{tpu_custom_call.1} parent=1 // pred_region
      %61 = dma.done [#allocation6], 1024
    $region33: #{tpu_custom_call.1} parent=1 // pred_fallthru
      _
    %v63 = vld [vmem:[#allocation2] sm:$0xff]
    %v64 = vld [vmem:[#allocation2 + $0x8] sm:$0xff]
    %v65 = vld [vmem:[#allocation2 + $0x10] sm:$0xff]
    %v66 = vld [vmem:[#allocation2 + $0x18] sm:$0xff]
    %v67 = vpack.c.bf16 %v65, %v63
    %v68 = vpack.c.bf16 %v66, %v64
    %v69 = vld [vmem:[#allocation5] sm:$0xf]
    %v70 = vld [vmem:[#allocation5 + $0x4] sm:$0xf]
    %v71 = vld [vmem:[#allocation5 + $0x8] sm:$0xf]
    %v72 = vld [vmem:[#allocation5 + $0xc] sm:$0xf]
    %v73 = vld [vmem:[#allocation5 + $0x10] sm:$0xf]
    %v74 = vld [vmem:[#allocation5 + $0x14] sm:$0xf]
    %v75 = vld [vmem:[#allocation5 + $0x18] sm:$0xf]
    %v76 = vld [vmem:[#allocation5 + $0x1c] sm:$0xf]
    %v77 = vld [vmem:[#allocation5 + $0x20] sm:$0xf]
    %v78 = vld [vmem:[#allocation5 + $0x24] sm:$0xf]
    %v79 = vld [vmem:[#allocation5 + $0x28] sm:$0xf]
    %v80 = vld [vmem:[#allocation5 + $0x2c] sm:$0xf]
    %v81 = vld [vmem:[#allocation5 + $0x30] sm:$0xf]
    %v82 = vld [vmem:[#allocation5 + $0x34] sm:$0xf]
    %v83 = vld [vmem:[#allocation5 + $0x38] sm:$0xf]
    %v84 = vld [vmem:[#allocation5 + $0x3c] sm:$0xf]
    %v85 = vld [vmem:[#allocation5 + $0x40] sm:$0xf]
    %v86 = vld [vmem:[#allocation5 + $0x44] sm:$0xf]
    %v87 = vld [vmem:[#allocation5 + $0x48] sm:$0xf]
    %v88 = vld [vmem:[#allocation5 + $0x4c] sm:$0xf]
    %v89 = vld [vmem:[#allocation5 + $0x50] sm:$0xf]
    %v90 = vld [vmem:[#allocation5 + $0x54] sm:$0xf]
    %v91 = vld [vmem:[#allocation5 + $0x58] sm:$0xf]
    %v92 = vld [vmem:[#allocation5 + $0x5c] sm:$0xf]
    %v93 = vld [vmem:[#allocation5 + $0x60] sm:$0xf]
    %v94 = vld [vmem:[%s2] sm:$0x1]
    %v96 = vlaneseq
    %v97 = vshrl.u32 %v96, 7
    %v98 = vsub.s32 0, %v97
    %v99 = vrot.slane %v94, %v98
    %v126 = vunpack.c.l.b16 %v69
    %v127 = vunpack.c.l.b16 %v70
    %v128 = vunpack.c.l.b16 %v71
    %v129 = vunpack.c.l.b16 %v72
    %v130 = vunpack.c.l.b16 %v73
    %v131 = vunpack.c.l.b16 %v74
    %v132 = vunpack.c.l.b16 %v75
    %v133 = vunpack.c.l.b16 %v76
    %v134 = vunpack.c.l.b16 %v77
    %v135 = vunpack.c.l.b16 %v78
    %v136 = vunpack.c.l.b16 %v79
    %v137 = vunpack.c.l.b16 %v80
    %v138 = vunpack.c.l.b16 %v81
    %v139 = vunpack.c.l.b16 %v82
    %v140 = vunpack.c.l.b16 %v83
    %v141 = vunpack.c.l.b16 %v84
    %v142 = vunpack.c.l.b16 %v85
    %v143 = vunpack.c.l.b16 %v86
    %v144 = vunpack.c.l.b16 %v87
    %v145 = vunpack.c.l.b16 %v88
    %v146 = vunpack.c.l.b16 %v89
    %v147 = vunpack.c.l.b16 %v90
    %v148 = vunpack.c.l.b16 %v91
    %v149 = vunpack.c.l.b16 %v92
    %v150 = vunpack.c.l.b16 %v93
    %v151 = vpack.c.b16 %v127, %v126
    %v152 = vpack.c.b16 %v129, %v128
    %v153 = vpack.c.b16 %v131, %v130
    %v154 = vpack.c.b16 %v133, %v132
    %v155 = vpack.c.b16 %v135, %v134
    %v156 = vpack.c.b16 %v137, %v136
    %v157 = vpack.c.b16 %v139, %v138
    %v158 = vpack.c.b16 %v141, %v140
    %v159 = vpack.c.b16 %v143, %v142
    %v160 = vpack.c.b16 %v145, %v144
    %v161 = vpack.c.b16 %v147, %v146
    %v162 = vpack.c.b16 %v149, %v148
    %v163 = vpack.c.b16 %v150, %v150
    %vm176 = vcmask 588800
    %v178 = vsel %vm176, %v68, 0
    %vm180 = vcmask 1043456
    %v182 = vsel %vm180, %v163, 0
    %184 = vmatprep.subr.bf16.mxu0 0
    %185 = vmatpush1.bf16.msra.mxu0 %v151
    %186 = vmatprep.subr.bf16.mxu0 0
    %187 = vmatpush1.bf16.msra.mxu0 %v152
    %188 = vmatprep.subr.bf16.mxu0 0
    %189 = vmatpush1.bf16.msra.mxu0 %v153
    %190 = vmatprep.subr.bf16.mxu0 0
    %191 = vmatpush1.bf16.msra.mxu0 %v154
    %192 = vmatprep.subr.bf16.mxu0 0
    %193 = vmatpush1.bf16.msra.mxu0 %v155
    %194 = vmatprep.subr.bf16.mxu0 0
    %195 = vmatpush1.bf16.msra.mxu0 %v156
    %196 = vmatprep.subr.bf16.mxu0 0
    %197 = vmatpush1.bf16.msra.mxu0 %v157
    %198 = vmatprep.subr.bf16.mxu0 0
    %199 = vmatpush1.bf16.msra.mxu0 %v158
    %200 = vmatprep.subr.bf16.mxu0 0
    %201 = vmatpush1.bf16.msra.mxu0 %v159
    %202 = vmatprep.subr.bf16.mxu0 0
    %203 = vmatpush1.bf16.msra.mxu0 %v160
    %204 = vmatprep.subr.bf16.mxu0 0
    %205 = vmatpush1.bf16.msra.mxu0 %v161
    %206 = vmatprep.subr.bf16.mxu0 0
    %207 = vmatpush1.bf16.msra.mxu0 %v162
    %208 = vmatprep.subr.bf16.mxu0 0
    %209 = vmatpush1.bf16.msra.mxu0 %v182
    %210 = vmatprep.subr.bf16.mxu0 0
    %211 = vmatpush1.bf16.msra.mxu0 0
    %212 = vmatprep.subr.bf16.mxu0 0
    %213 = vmatpush1.bf16.msra.mxu0 0
    %214 = vmatprep.subr.bf16.mxu0 0
    %215 = vmatpush1.bf16.msra.mxu0 0
    %216 = vmatprep.mubr.bf16.mxu0 %v178
    %217 = vmatmul.mubr.bf16.gmra.mrb[0].mxu0 %v67
    %v218 = vpop.f32.mrb[0].mxu0
    %v219 = vadd.f32 %v99, %v218
    %v220 = vpop.f32.mrb[0].mxu0
    %v221 = vpop.f32.mrb[0].mxu0
    %v222 = vadd.f32 %v99, %v221
    %v223 = vpop.f32.mrb[0].mxu0
    %224 = vdwg.mxu0
    %v225 = vmax.f32 %v219, 0.0
    %v226 = vmax.f32 %v222, 0.0
    %v227 = vpack.c.bf16 %v226, %v225
    %v228 = vld [vmem:[#allocation7] sm:$0xf]
    %v229 = vld [vmem:[#allocation7 + $0x4] sm:$0xf]
    %v230 = vld [vmem:[#allocation7 + $0x8] sm:$0xf]
    %v231 = vld [vmem:[#allocation7 + $0xc] sm:$0xf]
    %v232 = vld [vmem:[#allocation7 + $0x10] sm:$0xf]
    %v233 = vld [vmem:[#allocation7 + $0x14] sm:$0xf]
    %v234 = vld [vmem:[#allocation7 + $0x18] sm:$0xf]
    %v235 = vld [vmem:[#allocation7 + $0x1c] sm:$0xf]
    %v236 = vld [vmem:[#allocation7 + $0x20] sm:$0xf]
    %v237 = vld [vmem:[#allocation7 + $0x24] sm:$0xf]
    %v238 = vld [vmem:[#allocation7 + $0x28] sm:$0xf]
    %v239 = vld [vmem:[#allocation7 + $0x2c] sm:$0xf]
    %v240 = vld [vmem:[#allocation7 + $0x30] sm:$0xf]
    %v241 = vld [vmem:[#allocation7 + $0x34] sm:$0xf]
    %v242 = vld [vmem:[#allocation7 + $0x38] sm:$0xf]
    %v243 = vld [vmem:[#allocation7 + $0x3c] sm:$0xf]
    %v244 = vld [vmem:[%s4] sm:$0x1]
    %v246 = vlaneseq
    %v247 = vshrl.u32 %v246, 7
    %v248 = vsub.s32 0, %v247
    %v249 = vrot.slane %v244, %v248
    %v267 = vunpack.c.l.b16 %v228
    %v268 = vunpack.c.l.b16 %v229
    %v269 = vunpack.c.l.b16 %v230
    %v270 = vunpack.c.l.b16 %v231
    %v271 = vunpack.c.l.b16 %v232
    %v272 = vunpack.c.l.b16 %v233
    %v273 = vunpack.c.l.b16 %v234
    %v274 = vunpack.c.l.b16 %v235
    %v275 = vunpack.c.l.b16 %v236
    %v276 = vunpack.c.l.b16 %v237
    %v277 = vunpack.c.l.b16 %v238
    %v278 = vunpack.c.l.b16 %v239
    %v279 = vunpack.c.l.b16 %v240
    %v280 = vunpack.c.l.b16 %v241
    %v281 = vunpack.c.l.b16 %v242
    %v282 = vunpack.c.l.b16 %v243
    %v283 = vpack.c.b16 %v268, %v267
    %v284 = vpack.c.b16 %v270, %v269
    %v285 = vpack.c.b16 %v272, %v271
    %v286 = vpack.c.b16 %v274, %v273
    %v287 = vpack.c.b16 %v276, %v275
    %v288 = vpack.c.b16 %v278, %v277
    %v289 = vpack.c.b16 %v280, %v279
    %v290 = vpack.c.b16 %v282, %v281
    %299 = vmatprep.subr.bf16.mxu0 0
    %300 = vmatpush1.bf16.msra.mxu0 %v283
    %301 = vmatprep.subr.bf16.mxu0 0
    %302 = vmatpush1.bf16.msra.mxu0 %v284
    %303 = vmatprep.subr.bf16.mxu0 0
    %304 = vmatpush1.bf16.msra.mxu0 %v285
    %305 = vmatprep.subr.bf16.mxu0 0
    %306 = vmatpush1.bf16.msra.mxu0 %v286
    %307 = vmatprep.subr.bf16.mxu0 0
    %308 = vmatpush1.bf16.msra.mxu0 %v287
    %309 = vmatprep.subr.bf16.mxu0 0
    %310 = vmatpush1.bf16.msra.mxu0 %v288
    %311 = vmatprep.subr.bf16.mxu0 0
    %312 = vmatpush1.bf16.msra.mxu0 %v289
    %313 = vmatprep.subr.bf16.mxu0 0
    %314 = vmatpush1.bf16.msra.mxu0 %v290
    %315 = vmatprep.subr.bf16.mxu0 0
    %316 = vmatpush1.bf16.msra.mxu0 0
    %317 = vmatprep.subr.bf16.mxu0 0
    %318 = vmatpush1.bf16.msra.mxu0 0
    %319 = vmatprep.subr.bf16.mxu0 0
    %320 = vmatpush1.bf16.msra.mxu0 0
    %321 = vmatprep.subr.bf16.mxu0 0
    %322 = vmatpush1.bf16.msra.mxu0 0
    %323 = vmatprep.subr.bf16.mxu0 0
    %324 = vmatpush1.bf16.msra.mxu0 0
    %325 = vmatprep.subr.bf16.mxu0 0
    %326 = vmatpush1.bf16.msra.mxu0 0
    %327 = vmatprep.subr.bf16.mxu0 0
    %328 = vmatpush1.bf16.msra.mxu0 0
    %329 = vmatprep.subr.bf16.mxu0 0
    %330 = vmatpush1.bf16.msra.mxu0 0
    %331 = vmatprep.mubr.bf16.mxu0 0
    %332 = vmatmul.mubr.bf16.gmra.mrb[0].mxu0 %v227
    %v333 = vpop.f32.mrb[0].mxu0
    %v334 = vadd.f32 %v249, %v333
    %v335 = vpop.f32.mrb[0].mxu0
    %v336 = vpop.f32.mrb[0].mxu0
    %v337 = vadd.f32 %v249, %v336
    %v338 = vpop.f32.mrb[0].mxu0
    %339 = vdwg.mxu0
    %340 = vmax.xlane.f32.xlu0 %v334
    %v341 = vpop.xlane.xlu0 %340
    %342 = vmax.xlane.f32.xlu0 %v337
    %v343 = vpop.xlane.xlu0 %342
    %v344 = vsub.f32 %v334, %v341
    %v345 = vsub.f32 %v337, %v343
    %v346 = vmul.f32 %v344, 1.442695
    %v347 = vpow.pop %v346
    %v348 = vmul.f32 %v345, 1.442695
    %v349 = vpow.pop %v348
    %350 = vadd.xlane.f32.xlu0 %v347
    %v351 = vpop.xlane.xlu0 %350
    %352 = vadd.xlane.f32.xlu0 %v349
    %v353 = vpop.xlane.xlu0 %352
    %v354 = vrcp.pop %v351
    %v355 = vrcp.pop %v353
    %v356 = vmul.f32 %v347, %v354
    %v357 = vmul.f32 %v349, %v355
    %v358 = vpack.c.bf16 %v357, %v356
    %v360 = vunpack.c.l.b16 %v358
    %v361 = vunpack.c.h.b16 %v358
    %v362 = vpack.c.b16 %v360, %v360
    %v363 = vpack.c.b16 %v361, %v361
    %366 = vst [vmem:[#allocation8] sm:$0xf] %v362
    %367 = vst [vmem:[#allocation8 + $0x4] sm:$0xf] %v363
    // Predicated region
    $region34: #{tpu_custom_call.1} parent=1 // pred_check
      _
    $region35: #{tpu_custom_call.1} parent=1 // pred_check_branch
      %369 = sbr.rel (0) target = $region37
    $region36: #{tpu_custom_call.1} parent=1 // pred_region
      %s371 = ssub.s32 128, 128
      %372 = vsyncadd [#allocation4], %s371
      %s373 = sshll.u32 [#allocation8], 4
      %s374 = int_to_ptr.vmem [resolvable:$true] %s373
      %379 = dma.vmem_to_hbm [thread:$0]  %s374, 128, %s5, [#allocation4], 64, 64, 4
    $region37: #{tpu_custom_call.1} parent=1 // pred_fallthru
      _
    // Predicated region
    $region38: #{tpu_custom_call.1} parent=1 // pred_check
      _
    $region39: #{tpu_custom_call.1} parent=1 // pred_check_branch
      %381 = sbr.rel (0) target = $region41
    $region40: #{tpu_custom_call.1} parent=1 // pred_region
      %382 = dma.done [#allocation4], 128
    $region41: #{tpu_custom_call.1} parent=1 // pred_fallthru
      _
    %383 = vsyncpa [#allocation3], 1
    %384 = vsyncpa [#allocation6], 1
    %385 = vsyncpa [#allocation4], 1

</llo_original>
